<compile_context>
chip_gen: v6e
topology: v6e:2x2x1
jax: 0.10.0
libtpu: 0.0.40
codegen_flags: <defaults>
</compile_context>

<pallas_src>
import math
import functools

import jax
import jax.numpy as jnp
from jax.experimental import pallas as pl
from jax.experimental.pallas import tpu as pltpu


# ----------------------------------------------------------------------------
# Pallas kernel: per-patch stroke compositing (param2img_parallel hot path)
# ----------------------------------------------------------------------------
def _composite_kernel(canvas_ref, alpha_ref, colors_ref, out_ref,
                      *, n_strokes, n_chan, lanes):
    # canvas_ref : (TP, C*Lp)   f32   flattened canvas patches (channel-major)
    # alpha_ref  : (TP, S*Lp)   bf16  alpha * decision, stroke-major
    # colors_ref : (TP, S*C)    f32   per-stroke RGB color (foreground)
    # out_ref    : (TP, C*Lp)   f32
    # Lp is a multiple of 128, so every slice below is lane-aligned.
    for c in range(n_chan):                                    # static (C=3)
        ch = canvas_ref[:, c * lanes:(c + 1) * lanes]          # (TP, Lp) f32
        for i in range(n_strokes):                             # static (S small)
            a = alpha_ref[:, i * lanes:(i + 1) * lanes].astype(jnp.float32)
            j = i * n_chan + c
            col = colors_ref[:, j:j + 1]                       # (TP, 1) -> lane bcast
            # fused form of: col*a + ch*(1-a)   (last stroke on top, as in ref)
            ch = ch + a * (col - ch)
        out_ref[:, c * lanes:(c + 1) * lanes] = ch


def composite_patches(canvas_p, alpha_p, colors_p):
    """canvas_p: (P,C,PY,PX)  alpha_p: (P,S,PY,PX) (already * decision)
       colors_p: (P,S,C) -> returns composited patches (P,C,PY,PX) f32."""
    P, C, PY, PX = canvas_p.shape
    S = alpha_p.shape[1]
    L = PY * PX
    Lp = ((L + 127) // 128) * 128                   # lane-aligned pixel slab

    # ----- lane-dense flattened layouts -----------------------------------
    canvas2 = canvas_p.reshape(P, C, L).astype(jnp.float32)
    alpha2 = alpha_p.reshape(P, S, L).astype(jnp.bfloat16)   # bf16 stream
    if Lp != L:
        canvas2 = jnp.pad(canvas2, ((0, 0), (0, 0), (0, Lp - L)))
        alpha2 = jnp.pad(alpha2, ((0, 0), (0, 0), (0, Lp - L)))
    canvas2 = canvas2.reshape(P, C * Lp)
    alpha2 = alpha2.reshape(P, S * Lp)
    colors2 = colors_p.reshape(P, S * C).astype(jnp.float32)

    # ----- choose TP (patches per grid step) -------------------------------
    # HBM-bound kernel: aim ~4 MiB of traffic per step (amortizes ~0.35us
    # grid-step overhead to <10%); double-buffered VMEM stays ~8 MiB << 32 MiB.
    bytes_per_pixel = 2 * C * 4 + S * 2             # canvas rd + out wr (f32) + alpha (bf16)
    tp_target = max(1, (4 << 20) // (bytes_per_pixel * Lp))
    if P <= 8:
        TP = P                                      # tiny problem: one full-extent step
    else:
        tp = min(tp_target, (P + 1) // 2)           # keep >=2 steps (v7x 2-TC sharding)
        TP = max(16, (tp // 16) * 16)               # multiple of 16 (bf16 sublane packing)
        if TP >= P:
            TP = P
    Ppad = -(-P // TP) * TP
    if Ppad != P:
        pad = Ppad - P
        canvas2 = jnp.pad(canvas2, ((0, pad), (0, 0)))
        alpha2 = jnp.pad(alpha2, ((0, pad), (0, 0)))
        colors2 = jnp.pad(colors2, ((0, pad), (0, 0)))

    kernel = functools.partial(_composite_kernel, n_strokes=S, n_chan=C, lanes=Lp)
    out = pl.pallas_call(
        kernel,
        out_shape=jax.ShapeDtypeStruct((Ppad, C * Lp), jnp.float32),
        grid=(Ppad // TP,),
        in_specs=[
            pl.BlockSpec((TP, C * Lp), lambda t: (t, 0)),
            pl.BlockSpec((TP, S * Lp), lambda t: (t, 0)),
            pl.BlockSpec((TP, S * C), lambda t: (t, 0)),
        ],
        out_specs=pl.BlockSpec((TP, C * Lp), lambda t: (t, 0)),
        input_output_aliases={0: 0},                # reuse the canvas HBM buffer
        compiler_params=pltpu.CompilerParams(
            dimension_semantics=("parallel",),
            vmem_limit_bytes=32 * 1024 * 1024,      # v5e default is only 16 MiB
        ),
    )(canvas2, alpha2, colors2)

    out = out[:P].reshape(P, C, Lp)
    if Lp != L:
        out = out[:, :, :L]
    return out.reshape(P, C, PY, PX)


# ----------------------------------------------------------------------------
# Glue: synthetic stroke rasterizer (stand-in for painter.render + interpolate)
# ----------------------------------------------------------------------------
def make_meta_brushes(bh=32, bw=32):
    # kept only for interface parity with the reference (PNG brushes unavailable)
    ys = jnp.linspace(-1.0, 1.0, bh)[:, None]
    xs = jnp.linspace(-1.0, 1.0, bw)[None, :]
    vert = jnp.exp(-(xs ** 2) / 0.08 - (ys ** 2) / 0.6)
    horz = jnp.exp(-(xs ** 2) / 0.6 - (ys ** 2) / 0.08)
    return jnp.stack([vert[None], horz[None]], axis=0).astype(jnp.float32)


def param2stroke(param, H, W, meta_brushes):
    """param: (N,12) -> single-channel alpha (N,H,W) and stroke colors (N,3).

    TODO(synk): painter.render + PNG meta-brushes unavailable; this is a
    deterministic analytic, gather-free stand-in (foreground = flat color)."""
    del meta_brushes
    sig = jax.nn.sigmoid
    x0 = sig(param[:, 0]); y0 = sig(param[:, 1])
    w = sig(param[:, 2]) * 0.4 + 0.1
    h = sig(param[:, 3]) * 0.4 + 0.1
    theta = sig(param[:, 4]) * jnp.pi
    color = sig(param[:, 5:8])                                   # (N,3)

    ys = (jnp.arange(H, dtype=jnp.float32) + 0.5) / H
    xs = (jnp.arange(W, dtype=jnp.float32) + 0.5) / W
    Y, X = jnp.meshgrid(ys, xs, indexing="ij")                   # (H,W)
    dx = X[None] - x0[:, None, None]
    dy = Y[None] - y0[:, None, None]
    ct = jnp.cos(theta)[:, None, None]; st = jnp.sin(theta)[:, None, None]
    u = ct * dx + st * dy
    v = -st * dx + ct * dy
    nu = u / w[:, None, None]
    nv = v / h[:, None, None]
    inside = ((jnp.abs(nu) <= 1.0) & (jnp.abs(nv) <= 1.0)).astype(jnp.float32)
    # analytic brush texture, orientation picked by aspect ratio (no gathers)
    brush_v = jnp.exp(-(nu ** 2) / 0.08 - (nv ** 2) / 0.6)
    brush_h = jnp.exp(-(nu ** 2) / 0.6 - (nv ** 2) / 0.08)
    vert = (h > w).astype(jnp.float32)[:, None, None]
    brush = vert * brush_v + (1.0 - vert) * brush_h
    alpha = inside * brush
    return alpha.astype(jnp.float32), color.astype(jnp.float32)


# ----------------------------------------------------------------------------
# param2img_parallel (faithful port; compositing goes through the Pallas kernel)
# ----------------------------------------------------------------------------
def _param2img_parallel(param, decision, meta_brushes, cur_canvas):
    b, h, w, s, n_p = param.shape
    H, W = cur_canvas.shape[-2], cur_canvas.shape[-1]
    is_odd_y = (h % 2 == 1)
    is_odd_x = (w % 2 == 1)
    py = 2 * H // h
    px = 2 * W // w
    even_idx_y = list(range(0, h, 2)); even_idx_x = list(range(0, w, 2))
    odd_idx_y = list(range(1, h, 2)); odd_idx_x = list(range(1, w, 2))

    cur_canvas = jnp.pad(cur_canvas, ((0, 0), (0, 0), (py // 4, py // 4), (px // 4, px // 4)))

    # Render every stroke as a single-channel alpha + color; fold decision into
    # alpha (equivalent to zeroing unselected strokes before compositing).
    alpha, colors = param2stroke(param.reshape(-1, n_p), py, px, meta_brushes)
    alpha = alpha.reshape(b, h, w, s, py, px)
    colors = colors.reshape(b, h, w, s, 3)
    dec = decision.reshape(b, h, w, s).astype(jnp.float32)
    alpha = alpha * dec[..., None, None]

    def partial_render(this_canvas, ys, xs):
        ny, nx = len(ys), len(xs)
        y0 = ys[0] * (py // 2); x0 = xs[0] * (px // 2)
        # Within one parity pass the selected unfold patches tile a contiguous
        # non-overlapping region of the canvas.
        region = this_canvas[:, :, y0:y0 + ny * py, x0:x0 + nx * px]
        patches = region.reshape(b, 3, ny, py, nx, px).transpose(0, 2, 4, 1, 3, 5)
        sel_al = alpha[:, ys][:, :, xs]                           # (b,ny,nx,s,py,px)
        sel_col = colors[:, ys][:, :, xs]                         # (b,ny,nx,s,3)
        P = b * ny * nx
        out_p = composite_patches(
            patches.reshape(P, 3, py, px),
            sel_al.reshape(P, s, py, px),
            sel_col.reshape(P, s, 3),
        )
        out = (out_p.reshape(b, ny, nx, 3, py, px)
               .transpose(0, 3, 1, 4, 2, 5)
               .reshape(b, 3, ny * py, nx * px))
        return out

    if len(even_idx_y) > 0 and len(even_idx_x) > 0:
        canvas = partial_render(cur_canvas, even_idx_y, even_idx_x)
        if not is_odd_y:
            canvas = jnp.concatenate([canvas, cur_canvas[:, :, -py // 2:, :canvas.shape[3]]], axis=2)
        if not is_odd_x:
            canvas = jnp.concatenate([canvas, cur_canvas[:, :, :canvas.shape[2], -px // 2:]], axis=3)
        cur_canvas = canvas

    if len(odd_idx_y) > 0 and len(odd_idx_x) > 0:
        canvas = partial_render(cur_canvas, odd_idx_y, odd_idx_x)
        canvas = jnp.concatenate([cur_canvas[:, :, :py // 2, -canvas.shape[3]:], canvas], axis=2)
        canvas = jnp.concatenate([cur_canvas[:, :, -canvas.shape[2]:, :px // 2], canvas], axis=3)
        if is_odd_y:
            canvas = jnp.concatenate([canvas, cur_canvas[:, :, -py // 2:, :canvas.shape[3]]], axis=2)
        if is_odd_x:
            canvas = jnp.concatenate([canvas, cur_canvas[:, :, :canvas.shape[2], -px // 2:]], axis=3)
        cur_canvas = canvas

    if len(odd_idx_y) > 0 and len(even_idx_x) > 0:
        canvas = partial_render(cur_canvas, odd_idx_y, even_idx_x)
        canvas = jnp.concatenate([cur_canvas[:, :, :py // 2, :canvas.shape[3]], canvas], axis=2)
        if is_odd_y:
            canvas = jnp.concatenate([canvas, cur_canvas[:, :, -py // 2:, :canvas.shape[3]]], axis=2)
        if not is_odd_x:
            canvas = jnp.concatenate([canvas, cur_canvas[:, :, :canvas.shape[2], -px // 2:]], axis=3)
        cur_canvas = canvas

    if len(even_idx_y) > 0 and len(odd_idx_x) > 0:
        canvas = partial_render(cur_canvas, even_idx_y, odd_idx_x)
        canvas = jnp.concatenate([cur_canvas[:, :, :canvas.shape[2], :px // 2], canvas], axis=3)
        if not is_odd_y:
            canvas = jnp.concatenate([canvas, cur_canvas[:, :, -py // 2:, -canvas.shape[3]:]], axis=2)
        if is_odd_x:
            canvas = jnp.concatenate([canvas, cur_canvas[:, :, :canvas.shape[2], -px // 2:]], axis=3)
        cur_canvas = canvas

    cur_canvas = cur_canvas[:, :, py // 4: -py // 4, px // 4: -px // 4]
    return cur_canvas


# jit so wrapper-side pad/reshape/transpose/concat fuse under XLA (one trace
# per distinct layer shape).
param2img_parallel = jax.jit(_param2img_parallel)


def crop(img, h, w):
    H, W = img.shape[-2], img.shape[-1]
    pad_h = (H - h) // 2
    pad_w = (W - w) // 2
    rem_h = (H - h) % 2
    rem_w = (W - w) % 2
    return img[:, :, pad_h:H - pad_h - rem_h, pad_w:W - pad_w - rem_w]


# ----------------------------------------------------------------------------
# Render module port
# ----------------------------------------------------------------------------
class Render:
    def __init__(self, strokes, patch_size=16, original_h=32, original_w=32):
        self.patch_size = patch_size
        self.original_h = original_h
        self.original_w = original_w
        self.K = max(math.ceil(math.log2(max(original_h, original_w) / patch_size)), 0)
        self.params = [p for p, d in strokes]
        self.decision = [d for p, d in strokes]
        self.meta_brushes = make_meta_brushes(32, 32)   # interface parity only

    def forward(self, params):
        original_img_pad_size = self.patch_size * 2 ** self.K
        final_result = jnp.zeros((1, 3, original_img_pad_size, original_img_pad_size), jnp.float32)
        for layer in range(0, self.K + 1):
            param, decision = params[layer](), self.decision[layer]
            final_result = param2img_parallel(param, decision, self.meta_brushes, final_result)
        layer_size = self.patch_size * 2 ** self.K
        patch_num = (layer_size - self.patch_size) // self.patch_size + 1
        border_size = original_img_pad_size // (2 * patch_num)
        final_result = jnp.pad(final_result,
                               ((0, 0), (0, 0), (border_size, border_size), (border_size, border_size)))
        param, decision = params[-1](), self.decision[-1]
        final_result = param2img_parallel(param, decision, self.meta_brushes, final_result)
        final_result = final_result[:, :, border_size:-border_size, border_size:-border_size]
        final_result = crop(final_result, self.original_h, self.original_w)
        return final_result[0]


# ----------------------------------------------------------------------------
# Demo
# ----------------------------------------------------------------------------
if __name__ == "__main__":
    key = jax.random.PRNGKey(0)

    # ----- quick numerical self-check of the Pallas compositing kernel ------
    kc, ka, kcol = jax.random.split(key, 3)
    Pc, Sc, pyc, pxc = 5, 3, 6, 10              # L=60 (exercises lane padding path)
    cv = jax.random.uniform(kc, (Pc, 3, pyc, pxc), jnp.float32)
    al = jax.random.uniform(ka, (Pc, Sc, pyc, pxc), jnp.float32)
    co = jax.random.uniform(kcol, (Pc, Sc, 3), jnp.float32)
    got = composite_patches(cv, al, co)
    ref = cv
    for i in range(Sc):
        a = al[:, i][:, None]
        c = co[:, i][:, :, None, None]
        ref = c * a + ref * (1 - a)
    err = float(jnp.max(jnp.abs(got - ref)))
    assert err < 3e-2, err                       # bf16 alpha stream: ~0.4% blend error

    # ----- end-to-end Render forward ----------------------------------------
    patch_size, oh, ow = 16, 32, 32
    K = max(math.ceil(math.log2(max(oh, ow) / patch_size)), 0)         # 1
    s = 4                                                              # strokes per patch
    n_params = 12

    # patch-grid sizes: main layers 0..K, then the border layer
    layer_hw = [2 ** (l + 1) for l in range(K + 1)]                    # [2, 4]
    layer_size = patch_size * 2 ** K
    patch_num = (layer_size - patch_size) // patch_size + 1
    layer_hw.append(patch_num + 1)                                     # 3 (odd -> exercises odd passes)

    strokes = []
    for hw in layer_hw:
        key, k1, k2 = jax.random.split(key, 3)
        p = jax.random.normal(k1, (1, hw, hw, s, n_params), jnp.float32)
        d = (jax.random.uniform(k2, (1, hw, hw, s)) > 0.3).astype(jnp.int32)
        strokes.append((p, d))

    render = Render(strokes, patch_size=patch_size, original_h=oh, original_w=ow)
    params = [(lambda p=p: p) for p, _ in strokes]                     # callables, as in forward()

    out = render.forward(params)
    out = jax.block_until_ready(out)
    assert out.shape == (3, oh, ow), out.shape
    assert bool(jnp.isfinite(out).all())
    print("KERNEL_OK")
</pallas_src>

<mosaic_0001>
module attributes {stable_mosaic.version = 11 : i64} {
  func.func @_composite_kernel(%arg0: i32, %arg1: memref<5x384xf32, #tpu.memory_space<vmem>>, %arg2: memref<5x384xbf16, #tpu.memory_space<vmem>>, %arg3: memref<5x9xf32, #tpu.memory_space<vmem>>, %arg4: memref<5x384xf32, #tpu.memory_space<vmem>>) attributes {dimension_semantics = [#tpu.dimension_semantics<parallel>], iteration_bounds = array<i64: 1>, scalar_prefetch = 0 : i64, scratch_operands = 0 : i64, tpu.core_type = #tpu.core_type<tc>, window_params = [{transform_indices = @transform_0, window_bounds = array<i64: 5, 384>}, {transform_indices = @transform_1, window_bounds = array<i64: 5, 384>}, {transform_indices = @transform_2, window_bounds = array<i64: 5, 9>}, {transform_indices = @transform_3, window_bounds = array<i64: 5, 384>}]} {
    %c0 = arith.constant 0 : index
    %c0_0 = arith.constant 0 : index
    %0 = vector.load %arg1[%c0, %c0_0] : memref<5x384xf32, #tpu.memory_space<vmem>>, vector<5x128xf32>
    %c0_1 = arith.constant 0 : index
    %c0_2 = arith.constant 0 : index
    %1 = vector.load %arg2[%c0_1, %c0_2] : memref<5x384xbf16, #tpu.memory_space<vmem>>, vector<5x128xbf16>
    %2 = arith.extf %1 : vector<5x128xbf16> to vector<5x128xf32>
    %c0_3 = arith.constant 0 : index
    %c0_4 = arith.constant 0 : index
    %3 = vector.load %arg3[%c0_3, %c0_4] : memref<5x9xf32, #tpu.memory_space<vmem>>, vector<5x1xf32>
    %4 = vector.broadcast %3 : vector<5x1xf32> to vector<5x128xf32>
    %5 = arith.subf %4, %0 : vector<5x128xf32>
    %6 = arith.mulf %2, %5 : vector<5x128xf32>
    %7 = arith.addf %0, %6 : vector<5x128xf32>
    %c0_5 = arith.constant 0 : index
    %c128 = arith.constant 128 : index
    %8 = vector.load %arg2[%c0_5, %c128] : memref<5x384xbf16, #tpu.memory_space<vmem>>, vector<5x128xbf16>
    %9 = arith.extf %8 : vector<5x128xbf16> to vector<5x128xf32>
    %c0_6 = arith.constant 0 : index
    %c3 = arith.constant 3 : index
    %10 = vector.load %arg3[%c0_6, %c3] : memref<5x9xf32, #tpu.memory_space<vmem>>, vector<5x1xf32>
    %11 = vector.broadcast %10 : vector<5x1xf32> to vector<5x128xf32>
    %12 = arith.subf %11, %7 : vector<5x128xf32>
    %13 = arith.mulf %9, %12 : vector<5x128xf32>
    %14 = arith.addf %7, %13 : vector<5x128xf32>
    %c0_7 = arith.constant 0 : index
    %c256 = arith.constant 256 : index
    %15 = vector.load %arg2[%c0_7, %c256] : memref<5x384xbf16, #tpu.memory_space<vmem>>, vector<5x128xbf16>
    %16 = arith.extf %15 : vector<5x128xbf16> to vector<5x128xf32>
    %c0_8 = arith.constant 0 : index
    %c6 = arith.constant 6 : index
    %17 = vector.load %arg3[%c0_8, %c6] : memref<5x9xf32, #tpu.memory_space<vmem>>, vector<5x1xf32>
    %18 = vector.broadcast %17 : vector<5x1xf32> to vector<5x128xf32>
    %19 = arith.subf %18, %14 : vector<5x128xf32>
    %20 = arith.mulf %16, %19 : vector<5x128xf32>
    %21 = arith.addf %14, %20 : vector<5x128xf32>
    %c0_9 = arith.constant 0 : index
    %c0_10 = arith.constant 0 : index
    %22 = vector.load %arg4[%c0_9, %c0_10] : memref<5x384xf32, #tpu.memory_space<vmem>>, vector<5x128xf32>
    tpu.vector_store %arg4[%c0_9, %c0_10], %21 {strides = array<i32>} : memref<5x384xf32, #tpu.memory_space<vmem>>, vector<5x128xf32>,
    %c0_11 = arith.constant 0 : index
    %c128_12 = arith.constant 128 : index
    %23 = vector.load %arg1[%c0_11, %c128_12] : memref<5x384xf32, #tpu.memory_space<vmem>>, vector<5x128xf32>
    %c0_13 = arith.constant 0 : index
    %c0_14 = arith.constant 0 : index
    %24 = vector.load %arg2[%c0_13, %c0_14] : memref<5x384xbf16, #tpu.memory_space<vmem>>, vector<5x128xbf16>
    %25 = arith.extf %24 : vector<5x128xbf16> to vector<5x128xf32>
    %c0_15 = arith.constant 0 : index
    %c1 = arith.constant 1 : index
    %26 = vector.load %arg3[%c0_15, %c1] : memref<5x9xf32, #tpu.memory_space<vmem>>, vector<5x1xf32>
    %27 = vector.broadcast %26 : vector<5x1xf32> to vector<5x128xf32>
    %28 = arith.subf %27, %23 : vector<5x128xf32>
    %29 = arith.mulf %25, %28 : vector<5x128xf32>
    %30 = arith.addf %23, %29 : vector<5x128xf32>
    %c0_16 = arith.constant 0 : index
    %c128_17 = arith.constant 128 : index
    %31 = vector.load %arg2[%c0_16, %c128_17] : memref<5x384xbf16, #tpu.memory_space<vmem>>, vector<5x128xbf16>
    %32 = arith.extf %31 : vector<5x128xbf16> to vector<5x128xf32>
    %c0_18 = arith.constant 0 : index
    %c4 = arith.constant 4 : index
    %33 = vector.load %arg3[%c0_18, %c4] : memref<5x9xf32, #tpu.memory_space<vmem>>, vector<5x1xf32>
    %34 = vector.broadcast %33 : vector<5x1xf32> to vector<5x128xf32>
    %35 = arith.subf %34, %30 : vector<5x128xf32>
    %36 = arith.mulf %32, %35 : vector<5x128xf32>
    %37 = arith.addf %30, %36 : vector<5x128xf32>
    %c0_19 = arith.constant 0 : index
    %c256_20 = arith.constant 256 : index
    %38 = vector.load %arg2[%c0_19, %c256_20] : memref<5x384xbf16, #tpu.memory_space<vmem>>, vector<5x128xbf16>
    %39 = arith.extf %38 : vector<5x128xbf16> to vector<5x128xf32>
    %c0_21 = arith.constant 0 : index
    %c7 = arith.constant 7 : index
    %40 = vector.load %arg3[%c0_21, %c7] : memref<5x9xf32, #tpu.memory_space<vmem>>, vector<5x1xf32>
    %41 = vector.broadcast %40 : vector<5x1xf32> to vector<5x128xf32>
    %42 = arith.subf %41, %37 : vector<5x128xf32>
    %43 = arith.mulf %39, %42 : vector<5x128xf32>
    %44 = arith.addf %37, %43 : vector<5x128xf32>
    %c0_22 = arith.constant 0 : index
    %c128_23 = arith.constant 128 : index
    %45 = vector.load %arg4[%c0_22, %c128_23] : memref<5x384xf32, #tpu.memory_space<vmem>>, vector<5x128xf32>
    tpu.vector_store %arg4[%c0_22, %c128_23], %44 {strides = array<i32>} : memref<5x384xf32, #tpu.memory_space<vmem>>, vector<5x128xf32>,
    %c0_24 = arith.constant 0 : index
    %c256_25 = arith.constant 256 : index
    %46 = vector.load %arg1[%c0_24, %c256_25] : memref<5x384xf32, #tpu.memory_space<vmem>>, vector<5x128xf32>
    %c0_26 = arith.constant 0 : index
    %c0_27 = arith.constant 0 : index
    %47 = vector.load %arg2[%c0_26, %c0_27] : memref<5x384xbf16, #tpu.memory_space<vmem>>, vector<5x128xbf16>
    %48 = arith.extf %47 : vector<5x128xbf16> to vector<5x128xf32>
    %c0_28 = arith.constant 0 : index
    %c2 = arith.constant 2 : index
    %49 = vector.load %arg3[%c0_28, %c2] : memref<5x9xf32, #tpu.memory_space<vmem>>, vector<5x1xf32>
    %50 = vector.broadcast %49 : vector<5x1xf32> to vector<5x128xf32>
    %51 = arith.subf %50, %46 : vector<5x128xf32>
    %52 = arith.mulf %48, %51 : vector<5x128xf32>
    %53 = arith.addf %46, %52 : vector<5x128xf32>
    %c0_29 = arith.constant 0 : index
    %c128_30 = arith.constant 128 : index
    %54 = vector.load %arg2[%c0_29, %c128_30] : memref<5x384xbf16, #tpu.memory_space<vmem>>, vector<5x128xbf16>
    %55 = arith.extf %54 : vector<5x128xbf16> to vector<5x128xf32>
    %c0_31 = arith.constant 0 : index
    %c5 = arith.constant 5 : index
    %56 = vector.load %arg3[%c0_31, %c5] : memref<5x9xf32, #tpu.memory_space<vmem>>, vector<5x1xf32>
    %57 = vector.broadcast %56 : vector<5x1xf32> to vector<5x128xf32>
    %58 = arith.subf %57, %53 : vector<5x128xf32>
    %59 = arith.mulf %55, %58 : vector<5x128xf32>
    %60 = arith.addf %53, %59 : vector<5x128xf32>
    %c0_32 = arith.constant 0 : index
    %c256_33 = arith.constant 256 : index
    %61 = vector.load %arg2[%c0_32, %c256_33] : memref<5x384xbf16, #tpu.memory_space<vmem>>, vector<5x128xbf16>
    %62 = arith.extf %61 : vector<5x128xbf16> to vector<5x128xf32>
    %c0_34 = arith.constant 0 : index
    %c8 = arith.constant 8 : index
    %63 = vector.load %arg3[%c0_34, %c8] : memref<5x9xf32, #tpu.memory_space<vmem>>, vector<5x1xf32>
    %64 = vector.broadcast %63 : vector<5x1xf32> to vector<5x128xf32>
    %65 = arith.subf %64, %60 : vector<5x128xf32>
    %66 = arith.mulf %62, %65 : vector<5x128xf32>
    %67 = arith.addf %60, %66 : vector<5x128xf32>
    %c0_35 = arith.constant 0 : index
    %c256_36 = arith.constant 256 : index
    %68 = vector.load %arg4[%c0_35, %c256_36] : memref<5x384xf32, #tpu.memory_space<vmem>>, vector<5x128xf32>
    tpu.vector_store %arg4[%c0_35, %c256_36], %67 {strides = array<i32>} : memref<5x384xf32, #tpu.memory_space<vmem>>, vector<5x128xf32>,
    return
  }
  func.func @transform_0(%arg0: i32) -> (i32, i32) {
    %c0_i32 = arith.constant 0 : i32
    %c0_i32_0 = arith.constant 0 : i32
    return %arg0, %c0_i32 : i32, i32
  }
  func.func @transform_1(%arg0: i32) -> (i32, i32) {
    %c0_i32 = arith.constant 0 : i32
    %c0_i32_0 = arith.constant 0 : i32
    return %arg0, %c0_i32 : i32, i32
  }
  func.func @transform_2(%arg0: i32) -> (i32, i32) {
    %c0_i32 = arith.constant 0 : i32
    %c0_i32_0 = arith.constant 0 : i32
    return %arg0, %c0_i32 : i32, i32
  }
  func.func @transform_3(%arg0: i32) -> (i32, i32) {
    %c0_i32 = arith.constant 0 : i32
    %c0_i32_0 = arith.constant 0 : i32
    return %arg0, %c0_i32 : i32, i32
  }
}

</mosaic_0001>

<llo_original>
// kernel: tpu_custom_call.1
$region0: #{tpu_custom_call.1}
  #allocation0 [shape = 'u32[]', space=smem, size = 0x4, offset = 0x4, fixed_abs, tag = 'smem constant byte address 0x4 - core index']
  #allocation1 [shape = 'u32[144,128]{1,0:T(1,128)}', space=vmem, size = 0x12000, scoped, tag = 'internal scratch']
  %s0 = inlined_call_operand.hbm [shape: f32[5,384], index: 0, kind: input, shape index: {}, may-alias: {0,3}]
  %s1 = inlined_call_operand.vmem [shape: bf16[5,384], index: 1, kind: input, shape index: {}]
  %s2 = inlined_call_operand.vmem [shape: f32[5,9], index: 2, kind: input, shape index: {}]
  %s3 = inlined_call_operand.hbm [shape: f32[5,384], index: 3, kind: output, shape index: {}, may-alias: {0,3}]
  %s4 = sld [smem:[#allocation0]]
  $region26: #{tpu_custom_call.1} parent=0
    _
  %s6 = ssub.s32 1, %s4
  %s7 = scalar_select 0, %s6, %s4
  $region1: #{tpu_custom_call.1} parent=0
    #allocation2 [shape = 'u8[12288]{0}', space=vmem, size = 0x3000, scoped, tag = 'input window, operand 0, single buffered']
    #allocation3 [shape = 's32[1]{0}', space=sflag, size = 0x4, scoped, tag = 'scoped memory for tpu_custom_call.1']
    #allocation4 [shape = 's32[1]{0}', space=sflag, size = 0x4, scoped, tag = 'scoped memory for tpu_custom_call.1']
    #allocation5 [shape = 'u8[12288]{0}', space=vmem, size = 0x3000, scoped, tag = 'output window, operand 0, single buffered']
    %8 = vsyncpa [#allocation3], 0
    %9 = vsyncpa [#allocation4], 0
    // Predicated region
    $region2: #{tpu_custom_call.1} parent=1 // pred_check
      _
    $region3: #{tpu_custom_call.1} parent=1 // pred_check_branch
      %11 = sbr.rel (0) target = $region5
    $region4: #{tpu_custom_call.1} parent=1 // pred_region
      %s13 = ssub.s32 384, 384
      %14 = vsyncadd [#allocation3], %s13
      %s16 = sshll.u32 [#allocation2], 4
      %s17 = int_to_ptr.vmem [resolvable:$true] %s16
      %19 = dma.hbm_to_vmem [thread:$0]  %s0, 384, %s17, [#allocation3]
    $region5: #{tpu_custom_call.1} parent=1 // pred_fallthru
      _
    // Predicated region
    $region6: #{tpu_custom_call.1} parent=1 // pred_check
      _
    $region7: #{tpu_custom_call.1} parent=1 // pred_check_branch
      %21 = sbr.rel (0) target = $region9
    $region8: #{tpu_custom_call.1} parent=1 // pred_region
      _
    $region9: #{tpu_custom_call.1} parent=1 // pred_fallthru
      _
    // Predicated region
    $region10: #{tpu_custom_call.1} parent=1 // pred_check
      _
    $region11: #{tpu_custom_call.1} parent=1 // pred_check_branch
      %23 = sbr.rel (0) target = $region13
    $region12: #{tpu_custom_call.1} parent=1 // pred_region
      _
    $region13: #{tpu_custom_call.1} parent=1 // pred_fallthru
      _
    // Predicated region
    $region14: #{tpu_custom_call.1} parent=1 // pred_check
      _
    $region15: #{tpu_custom_call.1} parent=1 // pred_check_branch
      %25 = sbr.rel (0) target = $region17
    $region16: #{tpu_custom_call.1} parent=1 // pred_region
      %26 = dma.done [#allocation3], 384
    $region17: #{tpu_custom_call.1} parent=1 // pred_fallthru
      _
    %v27 = vld [vmem:[#allocation2] sm:$0x1f]
    %v28 = vld [vmem:[%s1] sm:$0x7]
    %v29 = vunpack.c.l.bf16 %v28
    %v30 = vld [vmem:[%s2] sm:$0x1f]
    %32 = vset.pattern.permute.xlu0 0
    %33 = vperm.xlu0 %32, %v30
    %v34 = vpop.permute.xlu0 %33
    %v36 = vsub.f32 %v34, %v27
    %v37 = vmul.f32 %v29, %v36
    %v38 = vadd.f32 %v27, %v37
    %v39 = vld [vmem:[%s1 + $0x4] sm:$0x7]
    %v40 = vunpack.c.l.bf16 %v39
    %41 = vset.pattern.permute.xlu0 3
    %42 = vperm.xlu0 %41, %v30
    %v43 = vpop.permute.xlu0 %42
    %v45 = vsub.f32 %v43, %v38
    %v46 = vmul.f32 %v40, %v45
    %v47 = vadd.f32 %v38, %v46
    %v48 = vld [vmem:[%s1 + $0x8] sm:$0x7]
    %v49 = vunpack.c.l.bf16 %v48
    %50 = vset.pattern.permute.xlu0 6
    %51 = vperm.xlu0 %50, %v30
    %v52 = vpop.permute.xlu0 %51
    %v54 = vsub.f32 %v52, %v47
    %v55 = vmul.f32 %v49, %v54
    %v56 = vadd.f32 %v47, %v55
    %57 = vst [vmem:[#allocation5] sm:$0x1f] %v56
    %v58 = vld [vmem:[#allocation2 + $0x8] sm:$0x1f]
    %v59 = vld [vmem:[%s1] sm:$0x7]
    %v60 = vunpack.c.l.bf16 %v59
    %v61 = vld [vmem:[%s2] sm:$0x1f]
    %63 = vset.pattern.permute.xlu0 1
    %64 = vperm.xlu0 %63, %v61
    %v65 = vpop.permute.xlu0 %64
    %v67 = vsub.f32 %v65, %v58
    %v68 = vmul.f32 %v60, %v67
    %v69 = vadd.f32 %v58, %v68
    %v70 = vld [vmem:[%s1 + $0x4] sm:$0x7]
    %v71 = vunpack.c.l.bf16 %v70
    %72 = vset.pattern.permute.xlu0 4
    %73 = vperm.xlu0 %72, %v61
    %v74 = vpop.permute.xlu0 %73
    %v76 = vsub.f32 %v74, %v69
    %v77 = vmul.f32 %v71, %v76
    %v78 = vadd.f32 %v69, %v77
    %v79 = vld [vmem:[%s1 + $0x8] sm:$0x7]
    %v80 = vunpack.c.l.bf16 %v79
    %81 = vset.pattern.permute.xlu0 7
    %82 = vperm.xlu0 %81, %v61
    %v83 = vpop.permute.xlu0 %82
    %v85 = vsub.f32 %v83, %v78
    %v86 = vmul.f32 %v80, %v85
    %v87 = vadd.f32 %v78, %v86
    %88 = vst [vmem:[#allocation5 + $0x8] sm:$0x1f] %v87
    %v89 = vld [vmem:[#allocation2 + $0x10] sm:$0x1f]
    %v90 = vld [vmem:[%s1] sm:$0x7]
    %v91 = vunpack.c.l.bf16 %v90
    %v92 = vld [vmem:[%s2] sm:$0x1f]
    %94 = vset.pattern.permute.xlu0 2
    %95 = vperm.xlu0 %94, %v92
    %v96 = vpop.permute.xlu0 %95
    %v98 = vsub.f32 %v96, %v89
    %v99 = vmul.f32 %v91, %v98
    %v100 = vadd.f32 %v89, %v99
    %v101 = vld [vmem:[%s1 + $0x4] sm:$0x7]
    %v102 = vunpack.c.l.bf16 %v101
    %103 = vset.pattern.permute.xlu0 5
    %104 = vperm.xlu0 %103, %v92
    %v105 = vpop.permute.xlu0 %104
    %v107 = vsub.f32 %v105, %v100
    %v108 = vmul.f32 %v102, %v107
    %v109 = vadd.f32 %v100, %v108
    %v110 = vld [vmem:[%s1 + $0x8] sm:$0x7]
    %v111 = vunpack.c.l.bf16 %v110
    %112 = vset.pattern.permute.xlu0 8
    %113 = vperm.xlu0 %112, %v92
    %v114 = vpop.permute.xlu0 %113
    %v116 = vsub.f32 %v114, %v109
    %v117 = vmul.f32 %v111, %v116
    %v118 = vadd.f32 %v109, %v117
    %119 = vst [vmem:[#allocation5 + $0x10] sm:$0x1f] %v118
    // Predicated region
    $region18: #{tpu_custom_call.1} parent=1 // pred_check
      _
    $region19: #{tpu_custom_call.1} parent=1 // pred_check_branch
      %121 = sbr.rel (0) target = $region21
    $region20: #{tpu_custom_call.1} parent=1 // pred_region
      %s123 = ssub.s32 384, 384
      %124 = vsyncadd [#allocation4], %s123
      %s126 = sshll.u32 [#allocation5], 4
      %s127 = int_to_ptr.vmem [resolvable:$true] %s126
      %129 = dma.vmem_to_hbm [thread:$0]  %s127, 384, %s3, [#allocation4]
    $region21: #{tpu_custom_call.1} parent=1 // pred_fallthru
      _
    // Predicated region
    $region22: #{tpu_custom_call.1} parent=1 // pred_check
      _
    $region23: #{tpu_custom_call.1} parent=1 // pred_check_branch
      %131 = sbr.rel (0) target = $region25
    $region24: #{tpu_custom_call.1} parent=1 // pred_region
      %132 = dma.done [#allocation4], 384
    $region25: #{tpu_custom_call.1} parent=1 // pred_fallthru
      _
    %133 = vsyncpa [#allocation3], 1
    %134 = vsyncpa [#allocation4], 1

</llo_original>
